<compile_context>
chip_gen: v7x
topology: tpu7x:2x2x1
jax: 0.10.0
libtpu: 0.0.40
codegen_flags: <defaults>
</compile_context>

<pallas_src>
import math

import jax
import jax.numpy as jnp
from jax.experimental import pallas as pl
from jax.experimental.pallas import tpu as pltpu


def _round_up(v, m):
    return ((v + m - 1) // m) * m


_VMEM_LIMIT = 32 * 1024 * 1024     # explicit: v5e's default scoped VMEM is only 16 MiB
_TARGET_BLOCK_BYTES = 1 << 20      # ~1 MiB of x per grid step (mem-bound sweet spot)
_MIN_PALLAS_BYTES = 256 * 1024     # below this, pallas_call overhead exceeds the work


# ----------------------------------------------------------------------------
# Pallas kernels: per-node relevance projection of SAGPooling's GraphConv(F, 1)
# ----------------------------------------------------------------------------
def _relevance_flat_kernel(x_ref, w_ref, b_ref, r_ref):
    # x block: (tm, 128) lane-dense rows, each row = 128/F consecutive nodes.
    # w block: (128, 2g) block-diagonal [w_rel | w_root] per node slot.
    # Result (tm, 2g) reshapes freely back to per-node (rel, root+b).
    # The kernel is HBM-bound; the mostly-zero W / narrow output are irrelevant.
    r_ref[...] = (
        jnp.dot(x_ref[...], w_ref[...], preferred_element_type=jnp.float32)
        + b_ref[...]
    )


def _relevance_wide_kernel(x_ref, w_ref, b_ref, r_ref):
    # F >= 128: contract the feature axis of both operands so the (2, tm)
    # output block is lane-dense (no (N, 1)-style masked stores).
    r_ref[...] = (
        jax.lax.dot_general(
            w_ref[...],
            x_ref[...],
            dimension_numbers=(((1,), (1,)), ((), ())),
            preferred_element_type=jnp.float32,
        )
        + b_ref[...]
    )


def _pick_rows(total_rows, bytes_per_row, sublane):
    """Rows per grid step: ~1 MiB blocks, >= 2 grid steps when data allows (v7x)."""
    target = max(sublane, (_TARGET_BLOCK_BYTES // bytes_per_row) // sublane * sublane)
    tm = total_rows if total_rows <= target else target
    if pl.cdiv(total_rows, tm) < 2 and total_rows >= 4 * sublane:
        tm = _round_up(pl.cdiv(total_rows, 2), sublane)
    return tm


def node_relevance(x, w_rel, w_root, b_rel, *, use_pallas=None):
    """Per-node relevance (r_rel, r_rootb), both (N,) float32:
         r_rel[i]   = w_rel  . x_i
         r_rootb[i] = w_root . x_i + b_rel     (bias folded in-kernel)
    """
    n, f = x.shape
    if use_pallas is None:
        use_pallas = n * f * x.dtype.itemsize >= _MIN_PALLAS_BYTES

    small_f_ok = f < 128 and 128 % f == 0 and n % (128 // f) == 0
    wide_f_ok = f >= 128

    if not use_pallas or not (small_f_ok or wide_f_ok):
        # Tiny inputs / ragged shapes: plain XLA GEMV (launch overhead >> work).
        # TODO(synk): pad-free Pallas handling of N % (128/F) != 0 tails.
        w = jnp.concatenate([w_rel, w_root], axis=0).astype(jnp.float32)
        r = jnp.dot(x.astype(jnp.float32), w.T)
        return r[:, 0], r[:, 1] + b_rel[0]

    params = pltpu.CompilerParams(
        dimension_semantics=("parallel",),   # megacore sharding on v7x
        vmem_limit_bytes=_VMEM_LIMIT,        # v5e default scoped VMEM is 16 MiB
    )

    if small_f_ok:
        g = 128 // f                          # nodes per 128-lane row
        m = n // g
        x_flat = x.reshape(m, 128)            # free: row-major reshape, no HBM copy
        # Block-diagonal weights: node slot s -> cols (2s, 2s+1) = (w_rel, w_root)
        # on feature rows [s*F, (s+1)*F).
        w_pair = jnp.stack([w_rel[0], w_root[0]], axis=1).astype(jnp.float32)   # (F, 2)
        w_blk = jnp.kron(jnp.eye(g, dtype=jnp.float32), w_pair).astype(x.dtype)  # (128, 2g)
        bias = (jnp.tile(jnp.array([0.0, 1.0], jnp.float32), g) * b_rel[0])[None, :]  # (1, 2g)

        tm = _pick_rows(m, 128 * x.dtype.itemsize, 8)
        r2 = pl.pallas_call(
            _relevance_flat_kernel,
            out_shape=jax.ShapeDtypeStruct((m, 2 * g), jnp.float32),
            grid=(pl.cdiv(m, tm),),           # no jnp.pad: boundary block handled
            in_specs=[
                pl.BlockSpec((tm, 128), lambda i: (i, 0)),     # x stream, lane-dense
                pl.BlockSpec((128, 2 * g), lambda i: (0, 0)),  # W, resident
                pl.BlockSpec((1, 2 * g), lambda i: (0, 0)),    # bias row, resident
            ],
            out_specs=pl.BlockSpec((tm, 2 * g), lambda i: (i, 0)),
            compiler_params=params,
        )(x_flat, w_blk, bias)
        r = r2.reshape(n, 2)                  # free reshape back to per-node pairs
        return r[:, 0], r[:, 1]

    # F >= 128: the (tm, F) stream is already lane-dense; output (2, N) is too.
    w = jnp.concatenate([w_rel, w_root], axis=0).astype(x.dtype)       # (2, F)
    bias = jnp.array([[0.0], [1.0]], jnp.float32) * b_rel[0]           # (2, 1)
    tm = _pick_rows(n, f * x.dtype.itemsize, 128)
    r = pl.pallas_call(
        _relevance_wide_kernel,
        out_shape=jax.ShapeDtypeStruct((2, n), jnp.float32),
        grid=(pl.cdiv(n, tm),),
        in_specs=[
            pl.BlockSpec((tm, f), lambda i: (i, 0)),
            pl.BlockSpec((2, f), lambda i: (0, 0)),
            pl.BlockSpec((2, 1), lambda i: (0, 0)),
        ],
        out_specs=pl.BlockSpec((2, tm), lambda i: (0, i)),
        compiler_params=params,
    )(x, w, bias)
    return r[0], r[1]


# ----------------------------------------------------------------------------
# Module forward (glue in plain JAX)
# ----------------------------------------------------------------------------
def pool_unpool_graph(x, edge_index, batch, params, ratio=0.5, use_pallas=None):
    """Equivalent of PoolUnpoolGraph.forward: (x_cg, edge_index_cg, num_nodes)."""
    del batch  # TODO(synk): only single-graph batches supported (per-graph top-k
    #            needs per-graph dynamic node counts; here k is static).
    n, _ = x.shape
    e = edge_index.shape[1]
    k = int(math.ceil(ratio * n))

    # GraphConv(F, 1) score, reordered to avoid any dense adjacency:
    #   s_i = sum_{j->i} (w_rel . x_j) + (w_root . x_i + b_rel)
    r_rel, r_rootb = node_relevance(
        x, params["w_rel"], params["w_root"], params["b_rel"], use_pallas=use_pallas)

    # O(E) neighbour aggregation: sort edges by destination once, then a sorted
    # segment-sum (cheaper lowering than a generic scatter-add on TPU).
    # TODO(synk): for E >> N replace with a PrefetchScalarGridSpec edge-chunk
    #             Pallas kernel accumulating into a VMEM (N,) block.
    src, dst = edge_index[0], edge_index[1]
    order = jnp.argsort(dst)
    agg = jax.ops.segment_sum(
        r_rel[src[order]], dst[order], num_segments=n, indices_are_sorted=True)
    score = agg + r_rootb                      # bias already folded in-kernel

    # top-k node selection (descending score), as in PyG's `topk`.
    score_k, perm = jax.lax.top_k(score, k)

    # x_cg = x[perm] * tanh(score[perm])  (multiplier = 1).  F is small, so the
    # gather + gate is left to XLA fusion.
    # TODO(synk): for large F fuse into a Pallas row-gather (perm via scalar
    #             prefetch + pl.Element(1) row BlockSpec).
    x_cg = x[perm] * jnp.tanh(score_k)[:, None]

    # filter_adj: keep edges whose endpoints both survive, relabel to pooled
    # ids, compact survivors to the front.  Tail padded with -1 to keep a
    # static shape (true edge count = (edge_index_cg[0] >= 0).sum()).
    new_id = jnp.full((n,), -1, jnp.int32).at[perm].set(jnp.arange(k, dtype=jnp.int32))
    row = new_id[src]
    col = new_id[dst]
    valid = (row >= 0) & (col >= 0)
    row = jnp.where(valid, row, -1)
    col = jnp.where(valid, col, -1)
    dest = jnp.where(valid, jnp.cumsum(valid.astype(jnp.int32)) - 1, e)
    packed = jnp.full((2, e + 1), -1, jnp.int32)
    packed = packed.at[0, dest].set(row).at[1, dest].set(col)
    edge_index_cg = packed[:, :e]

    return x_cg, edge_index_cg, k


def init_params(key, num_node_features):
    """Deterministic init of SAGPooling's GraphConv(F, 1) parameters."""
    k1, k2, k3 = jax.random.split(key, 3)
    bound = 1.0 / math.sqrt(num_node_features)
    w_rel = jax.random.uniform(k1, (1, num_node_features), jnp.float32, -bound, bound)
    w_root = jax.random.uniform(k2, (1, num_node_features), jnp.float32, -bound, bound)
    b_rel = jax.random.uniform(k3, (1,), jnp.float32, -bound, bound)
    return {"w_rel": w_rel, "w_root": w_root, "b_rel": b_rel}


if __name__ == "__main__":
    key = jax.random.PRNGKey(0)
    k_x, k_e, k_p, k_x2, k_p2 = jax.random.split(key, 5)

    # F=8 exercises the lane-dense "flat" Pallas path (128 % F == 0); N is a
    # multiple of 128/F = 16.
    N, F, E = 2048, 8, 8192
    x = jax.random.normal(k_x, (N, F), jnp.float32)
    edge_index = jax.random.randint(k_e, (2, E), 0, N, dtype=jnp.int32)
    batch = jnp.zeros((N,), jnp.int32)  # single graph
    params = init_params(k_p, F)

    # --- sanity check: flat (small-F) Pallas path vs plain JAX ---
    r_rel, r_rootb = node_relevance(
        x, params["w_rel"], params["w_root"], params["b_rel"], use_pallas=True)
    assert jnp.allclose(r_rel, x @ params["w_rel"][0], atol=1e-4, rtol=1e-4)
    assert jnp.allclose(r_rootb, x @ params["w_root"][0] + params["b_rel"][0],
                        atol=1e-4, rtol=1e-4)

    # --- sanity check: wide (F >= 128) Pallas path vs plain JAX ---
    N2, F2 = 512, 128
    x2 = jax.random.normal(k_x2, (N2, F2), jnp.float32)
    p2 = init_params(k_p2, F2)
    r2_rel, r2_rootb = node_relevance(
        x2, p2["w_rel"], p2["w_root"], p2["b_rel"], use_pallas=True)
    assert jnp.allclose(r2_rel, x2 @ p2["w_rel"][0], atol=1e-4, rtol=1e-4)
    assert jnp.allclose(r2_rootb, x2 @ p2["w_root"][0] + p2["b_rel"][0],
                        atol=1e-4, rtol=1e-4)

    # --- full forward with the Pallas relevance kernel in the loop ---
    x_cg, edge_index_cg, num_nodes_unpooled = pool_unpool_graph(
        x, edge_index, batch, params, use_pallas=True)
    jax.block_until_ready(x_cg)
    jax.block_until_ready(edge_index_cg)

    assert x_cg.shape == (num_nodes_unpooled, F)
    assert edge_index_cg.shape == (2, E)
    assert num_nodes_unpooled == math.ceil(0.5 * N)

    # order-invariant cross-check against a pure-JAX reference forward
    # (top_k tie order may differ at fp precision, so compare column sums).
    w_all = jnp.concatenate([params["w_rel"], params["w_root"]], axis=0)
    r_ref = x @ w_all.T
    agg_ref = jnp.zeros((N,), jnp.float32).at[edge_index[1]].add(
        r_ref[:, 0][edge_index[0]])
    score_ref = agg_ref + r_ref[:, 1] + params["b_rel"][0]
    sk_ref, perm_ref = jax.lax.top_k(score_ref, num_nodes_unpooled)
    x_cg_ref = x[perm_ref] * jnp.tanh(sk_ref)[:, None]
    assert jnp.allclose(jnp.sum(x_cg, axis=0), jnp.sum(x_cg_ref, axis=0),
                        atol=1e-2, rtol=1e-3)

    print("KERNEL_OK")
</pallas_src>

<mosaic_0001>
module attributes {stable_mosaic.version = 11 : i64} {
  func.func @_relevance_flat_kernel(%arg0: i32, %arg1: memref<64x128xf32, #tpu.memory_space<vmem>>, %arg2: memref<128x32xf32, #tpu.memory_space<vmem>>, %arg3: memref<1x32xf32, #tpu.memory_space<vmem>>, %arg4: memref<64x32xf32, #tpu.memory_space<vmem>>) attributes {dimension_semantics = [#tpu.dimension_semantics<parallel>], iteration_bounds = array<i64: 2>, scalar_prefetch = 0 : i64, scratch_operands = 0 : i64, tpu.core_type = #tpu.core_type<tc>, window_params = [{transform_indices = @transform_0, window_bounds = array<i64: 64, 128>}, {pipeline_mode = #tpu.pipeline_mode<synchronous>, transform_indices = @transform_1, window_bounds = array<i64: 128, 32>}, {pipeline_mode = #tpu.pipeline_mode<synchronous>, transform_indices = @transform_2, window_bounds = array<i64: 1, 32>}, {transform_indices = @transform_3, window_bounds = array<i64: 64, 32>}]} {
    %c0 = arith.constant 0 : index
    %c0_0 = arith.constant 0 : index
    %0 = vector.load %arg1[%c0, %c0_0] : memref<64x128xf32, #tpu.memory_space<vmem>>, vector<64x128xf32>
    %c0_1 = arith.constant 0 : index
    %c0_2 = arith.constant 0 : index
    %1 = vector.load %arg2[%c0_1, %c0_2] : memref<128x32xf32, #tpu.memory_space<vmem>>, vector<128x32xf32>
    %cst = arith.constant dense<0.000000e+00> : vector<64x32xf32>
    %2 = tpu.matmul %0, %1, %cst {dimension_numbers = #tpu.dot_dimension_numbers<[1], [0], [0], [1], [0, 0, 1, 1], [], []>} : vector<64x128xf32>, vector<128x32xf32>, vector<64x32xf32> -> vector<64x32xf32>
    %c0_3 = arith.constant 0 : index
    %c0_4 = arith.constant 0 : index
    %3 = vector.load %arg3[%c0_3, %c0_4] : memref<1x32xf32, #tpu.memory_space<vmem>>, vector<1x32xf32>
    %4 = vector.broadcast %3 : vector<1x32xf32> to vector<64x32xf32>
    %5 = arith.addf %2, %4 : vector<64x32xf32>
    %c0_5 = arith.constant 0 : index
    %c0_6 = arith.constant 0 : index
    %6 = vector.load %arg4[%c0_5, %c0_6] : memref<64x32xf32, #tpu.memory_space<vmem>>, vector<64x32xf32>
    tpu.vector_store %arg4[%c0_5, %c0_6], %5 {strides = array<i32>} : memref<64x32xf32, #tpu.memory_space<vmem>>, vector<64x32xf32>,
    return
  }
  func.func @transform_0(%arg0: i32) -> (i32, i32) {
    %c0_i32 = arith.constant 0 : i32
    %c0_i32_0 = arith.constant 0 : i32
    return %arg0, %c0_i32 : i32, i32
  }
  func.func @transform_1(%arg0: i32) -> (i32, i32) {
    %c0_i32 = arith.constant 0 : i32
    %c0_i32_0 = arith.constant 0 : i32
    %c0_i32_1 = arith.constant 0 : i32
    return %c0_i32, %c0_i32_0 : i32, i32
  }
  func.func @transform_2(%arg0: i32) -> (i32, i32) {
    %c0_i32 = arith.constant 0 : i32
    %c0_i32_0 = arith.constant 0 : i32
    %c0_i32_1 = arith.constant 0 : i32
    return %c0_i32, %c0_i32_0 : i32, i32
  }
  func.func @transform_3(%arg0: i32) -> (i32, i32) {
    %c0_i32 = arith.constant 0 : i32
    %c0_i32_0 = arith.constant 0 : i32
    return %arg0, %c0_i32 : i32, i32
  }
}

</mosaic_0001>

<llo_original>
// kernel: tpu_custom_call.1
$region0: #{tpu_custom_call.1}
  #allocation0 [shape = 'u32[]', space=smem, size = 0x4, offset = 0x4, fixed_abs, tag = 'smem constant byte address 0x4 - core index']
  #allocation1 [shape = 'u32[144,128]{1,0:T(1,128)}', space=vmem, size = 0x12000, scoped, tag = 'internal scratch']
  %s0 = inlined_call_operand.vmem [shape: f32[128,128], index: 0, kind: input, shape index: {}]
  %s1 = inlined_call_operand.vmem [shape: f32[128,32], index: 1, kind: input, shape index: {}]
  %s2 = inlined_call_operand.vmem [shape: f32[1,32], index: 2, kind: input, shape index: {}]
  %s3 = inlined_call_operand.vmem [shape: f32[128,32], index: 3, kind: output, shape index: {}]
  %s4 = sld [smem:[#allocation0]]
  $region45: #{tpu_custom_call.1} parent=0
    _
  %s6 = ssub.s32 1, %s4
  %s7 = scalar_select 0, %s6, %s4
  loop: start=0, step=1, limit=4
  $region2: #{tpu_custom_call.1} parent=0 // loop_pre_header
    _
  $region3: #{tpu_custom_call.1} parent=0 // loop_header
    %s9 = sphi 0, %s13
    %p10 = scmp.ge.s32.totalorder %s9, 4
    %s19 = sphi 0, %s21
    %s22 = sphi 0, %s19
    %s23 = sphi 0, %s22
    %s39 = sphi 0, %s23
    %s43 = sphi 0, %s43
    %s45 = sphi 0, %s43
    %s46 = sphi 0, %s45
    %s60 = sphi 0, %s46
    %s64 = sphi 0, %s64
    %s66 = sphi 0, %s64
    %s67 = sphi 0, %s66
    %s81 = sphi 0, %s67
    %s87 = sphi 0, %s89
    %s90 = sphi 0, %s87
    %s91 = sphi 0, %s90
    %s107 = sphi 0, %s91
  $region4: #{tpu_custom_call.1} parent=0 // loop_header_branch
    %12 = sbr.rel (%p10) target = $region8
  $region5: #{tpu_custom_call.1} parent=0 // loop_body
    %s14 = ssub.s32 %s9, 1
    %s15 = ssub.s32 %s9, 2
    %s16 = sadd.s32 %s9, 1
    %s17 = ssub.s32 %s9, %s16
    %p18 = scmp.eq.s32.totalorder %s17, 0
    %s20 = sadd.s32 %s19, 1
    %s21 = scalar_select %p18, %s19, %s20
    %p24 = pneg %p18
    %p25 = scmp.eq.s32.totalorder %s9, 1
    %p26 = por %p24, %p25
    %p27 = scmp.ne.s32.totalorder %s19, %s22
    %p28 = scmp.eq.s32.totalorder %s9, 0
    %p29 = por %p27, %p28
    %p30 = scmp.ne.s32.totalorder %s19, %s22
    %p31 = scmp.eq.s32.totalorder %s14, 1
    %p32 = por %p30, %p31
    %p33 = scmp.ne.s32.totalorder %s22, %s23
    %p34 = scmp.eq.s32.totalorder %s14, 0
    %p35 = por %p33, %p34
    %p36 = scmp.ne.s32.totalorder %s22, %s23
    %p37 = scmp.eq.s32.totalorder %s15, 1
    %p38 = por %p36, %p37
    %p40 = scmp.ne.s32.totalorder %s23, %s39
    %p41 = scmp.eq.s32.totalorder %s15, 0
    %p42 = por %p40, %p41
    %s44 = sadd.s32 %s43, 1
    %p47 = scmp.eq.s32.totalorder %s9, 1
    %p48 = scmp.ne.s32.totalorder %s43, %s45
    %p49 = scmp.eq.s32.totalorder %s9, 0
    %p50 = por %p48, %p49
    %p51 = scmp.ne.s32.totalorder %s43, %s45
    %p52 = scmp.eq.s32.totalorder %s14, 1
    %p53 = por %p51, %p52
    %p54 = scmp.ne.s32.totalorder %s45, %s46
    %p55 = scmp.eq.s32.totalorder %s14, 0
    %p56 = por %p54, %p55
    %p57 = scmp.ne.s32.totalorder %s45, %s46
    %p58 = scmp.eq.s32.totalorder %s15, 1
    %p59 = por %p57, %p58
    %p61 = scmp.ne.s32.totalorder %s46, %s60
    %p62 = scmp.eq.s32.totalorder %s15, 0
    %p63 = por %p61, %p62
    %s65 = sadd.s32 %s64, 1
    %p68 = scmp.eq.s32.totalorder %s9, 1
    %p69 = scmp.ne.s32.totalorder %s64, %s66
    %p70 = scmp.eq.s32.totalorder %s9, 0
    %p71 = por %p69, %p70
    %p72 = scmp.ne.s32.totalorder %s64, %s66
    %p73 = scmp.eq.s32.totalorder %s14, 1
    %p74 = por %p72, %p73
    %p75 = scmp.ne.s32.totalorder %s66, %s67
    %p76 = scmp.eq.s32.totalorder %s14, 0
    %p77 = por %p75, %p76
    %p78 = scmp.ne.s32.totalorder %s66, %s67
    %p79 = scmp.eq.s32.totalorder %s15, 1
    %p80 = por %p78, %p79
    %p82 = scmp.ne.s32.totalorder %s67, %s81
    %p83 = scmp.eq.s32.totalorder %s15, 0
    %p84 = por %p82, %p83
    %s85 = ssub.s32 %s9, %s16
    %p86 = scmp.eq.s32.totalorder %s85, 0
    %s88 = sadd.s32 %s87, 1
    %s89 = scalar_select %p86, %s87, %s88
    %p92 = pneg %p86
    %p93 = scmp.eq.s32.totalorder %s9, 1
    %p94 = por %p92, %p93
    %p95 = scmp.ne.s32.totalorder %s87, %s90
    %p96 = scmp.eq.s32.totalorder %s9, 0
    %p97 = por %p95, %p96
    %p98 = scmp.ne.s32.totalorder %s87, %s90
    %p99 = scmp.eq.s32.totalorder %s14, 1
    %p100 = por %p98, %p99
    %p101 = scmp.ne.s32.totalorder %s90, %s91
    %p102 = scmp.eq.s32.totalorder %s14, 0
    %p103 = por %p101, %p102
    %p104 = scmp.ne.s32.totalorder %s90, %s91
    %p105 = scmp.eq.s32.totalorder %s15, 1
    %p106 = por %p104, %p105
    %p108 = scmp.ne.s32.totalorder %s91, %s107
    %p109 = scmp.eq.s32.totalorder %s15, 0
    %p110 = por %p108, %p109
    %p111 = scmp.le.s32.totalorder 1, %s9
    %p112 = scmp.lt.s32.totalorder %s9, 3
    %p113 = pnand %p111, %p112
    %p114 = pneg %p113
    // Predicated region
    $region9: #{tpu_custom_call.1} parent=5 // pred_check
      _
    $region10: #{tpu_custom_call.1} parent=5 // pred_check_branch
      %116 = sbr.rel (%p113) target = $region12
    $region11: #{tpu_custom_call.1} parent=5 // pred_region
      %s117 = ssub.s32 %s9, 1
      // Predicated region
      $region13: #{tpu_custom_call.1} parent=11 // pred_check
        %p118 = pneg %p56
      $region14: #{tpu_custom_call.1} parent=11 // pred_check_branch
        %120 = sbr.rel (%p118) target = $region16
      $region15: #{tpu_custom_call.1} parent=11 // pred_region
        _
      $region16: #{tpu_custom_call.1} parent=11 // pred_fallthru
        _
      // Predicated region
      $region17: #{tpu_custom_call.1} parent=11 // pred_check
        %p121 = pneg %p77
      $region18: #{tpu_custom_call.1} parent=11 // pred_check_branch
        %123 = sbr.rel (%p121) target = $region20
      $region19: #{tpu_custom_call.1} parent=11 // pred_region
        _
      $region20: #{tpu_custom_call.1} parent=11 // pred_fallthru
        _
    $region12: #{tpu_custom_call.1} parent=5 // pred_fallthru
      _
    %p124 = scmp.lt.s32.totalorder %s9, 2
    // Predicated region
    $region21: #{tpu_custom_call.1} parent=5 // pred_check
      %p125 = pneg %p124
    $region22: #{tpu_custom_call.1} parent=5 // pred_check_branch
      %127 = sbr.rel (%p125) target = $region24
    $region23: #{tpu_custom_call.1} parent=5 // pred_region
      // Predicated region
      $region25: #{tpu_custom_call.1} parent=23 // pred_check
        %p128 = pneg %p29
      $region26: #{tpu_custom_call.1} parent=23 // pred_check_branch
        %130 = sbr.rel (%p128) target = $region28
      $region27: #{tpu_custom_call.1} parent=23 // pred_region
        %s131 = smul.u32 8, %s9
        %p132 = scmp.lt.s32.totalorder %s131, 15
        %s133 = scalar_select %p132, %s131, 15
        %s134 = smul.addr %s133, 8
        %s135 = scalar_lea.vmem %s0, %s134
        %s136 = smul.u32 8, %s9
      $region28: #{tpu_custom_call.1} parent=23 // pred_fallthru
        _
    $region24: #{tpu_custom_call.1} parent=5 // pred_fallthru
      _
    %p137 = scmp.le.s32.totalorder 1, %s9
    %p138 = scmp.lt.s32.totalorder %s9, 3
    %p139 = pnand %p137, %p138
    %p140 = pneg %p139
    // Predicated region
    $region29: #{tpu_custom_call.1} parent=5 // pred_check
      _
    $region30: #{tpu_custom_call.1} parent=5 // pred_check_branch
      %142 = sbr.rel (%p139) target = $region32
    $region31: #{tpu_custom_call.1} parent=5 // pred_region
      %s143 = ssub.s32 %s9, 1
      %s144 = smul.u32 8, %s14
      %p145 = scmp.lt.s32.totalorder %s144, 15
      %s146 = scalar_select %p145, %s144, 15
      %s147 = smul.addr %s146, 8
      %s148 = scalar_lea.vmem %s0, %s147
      %p149 = pneg %p35
      %p150 = pneg %p32
      %p151 = pneg %p56
      %p152 = pneg %p53
      %p153 = pneg %p77
      %p154 = pneg %p74
      %p155 = pneg %p103
      %p156 = pneg %p100
      %s157 = smul.u32 8, %s14
      %p158 = scmp.lt.s32.totalorder %s157, 15
      %s159 = scalar_select %p158, %s157, 15
      %s160 = smul.addr %s159, 8
      %s161 = scalar_lea.vmem %s3, %s160
      %s162 = smul.u32 8, %s14
      %p163 = scmp.lt.s32.totalorder %s162, 15
      %s164 = scalar_select %p163, %s162, 15
      %s165 = smul.addr %s164, 8
      %s166 = scalar_lea.vmem %s0, %s165
      %s167 = smul.u32 8, %s14
      %s168 = smul.u32 8, %s14
      %p169 = scmp.lt.s32.totalorder %s168, 15
      %s170 = scalar_select %p169, %s168, 15
      %s171 = smul.addr %s170, 8
      %s172 = scalar_lea.vmem %s3, %s171
      %s173 = smul.u32 8, %s14
      %v174 = vld [vmem:[%s166] sm:$0xff]
      %v175 = vld [vmem:[%s166 + $0x8] sm:$0xff]
      %v176 = vld [vmem:[%s166 + $0x10] sm:$0xff]
      %v177 = vld [vmem:[%s166 + $0x18] sm:$0xff]
      %v178 = vld [vmem:[%s166 + $0x20] sm:$0xff]
      %v179 = vld [vmem:[%s166 + $0x28] sm:$0xff]
      %v180 = vld [vmem:[%s166 + $0x30] sm:$0xff]
      %v181 = vld [vmem:[%s166 + $0x38] sm:$0xff]
      %v182 = vld [vmem:[%s1] sm:$0xff]
      %v183 = vld [vmem:[%s1 + $0x8] sm:$0xff]
      %v184 = vld [vmem:[%s1 + $0x10] sm:$0xff]
      %v185 = vld [vmem:[%s1 + $0x18] sm:$0xff]
      %v186 = vld [vmem:[%s1 + $0x20] sm:$0xff]
      %v187 = vld [vmem:[%s1 + $0x28] sm:$0xff]
      %v188 = vld [vmem:[%s1 + $0x30] sm:$0xff]
      %v189 = vld [vmem:[%s1 + $0x38] sm:$0xff]
      %v190 = vld [vmem:[%s1 + $0x40] sm:$0xff]
      %v191 = vld [vmem:[%s1 + $0x48] sm:$0xff]
      %v192 = vld [vmem:[%s1 + $0x50] sm:$0xff]
      %v193 = vld [vmem:[%s1 + $0x58] sm:$0xff]
      %v194 = vld [vmem:[%s1 + $0x60] sm:$0xff]
      %v195 = vld [vmem:[%s1 + $0x68] sm:$0xff]
      %v196 = vld [vmem:[%s1 + $0x70] sm:$0xff]
      %v197 = vld [vmem:[%s1 + $0x78] sm:$0xff]
      %v198 = vld [vmem:[%s2] sm:$0x1]
      %v200 = vlaneseq
      %v201 = vshrl.u32 %v200, 7
      %v202 = vsub.s32 0, %v201
      %v203 = vrot.slane %v198, %v202
      %205 = vmatprep.subr.mxu0 0.0
      %206 = vmatpush1.msra.mxu0 %v182
      %207 = vmatprep.subr.mxu0 0.0
      %208 = vmatpush1.msra.mxu0 %v183
      %209 = vmatprep.subr.mxu0 0.0
      %210 = vmatpush1.msra.mxu0 %v184
      %211 = vmatprep.subr.mxu0 0.0
      %212 = vmatpush1.msra.mxu0 %v185
      %213 = vmatprep.subr.mxu0 0.0
      %214 = vmatpush1.msra.mxu0 %v186
      %215 = vmatprep.subr.mxu0 0.0
      %216 = vmatpush1.msra.mxu0 %v187
      %217 = vmatprep.subr.mxu0 0.0
      %218 = vmatpush1.msra.mxu0 %v188
      %219 = vmatprep.subr.mxu0 0.0
      %220 = vmatpush1.msra.mxu0 %v189
      %221 = vmatprep.subr.mxu0 0.0
      %222 = vmatpush1.msra.mxu0 %v190
      %223 = vmatprep.subr.mxu0 0.0
      %224 = vmatpush1.msra.mxu0 %v191
      %225 = vmatprep.subr.mxu0 0.0
      %226 = vmatpush1.msra.mxu0 %v192
      %227 = vmatprep.subr.mxu0 0.0
      %228 = vmatpush1.msra.mxu0 %v193
      %229 = vmatprep.subr.mxu0 0.0
      %230 = vmatpush1.msra.mxu0 %v194
      %231 = vmatprep.subr.mxu0 0.0
      %232 = vmatpush1.msra.mxu0 %v195
      %233 = vmatprep.subr.mxu0 0.0
      %234 = vmatpush1.msra.mxu0 %v196
      %235 = vmatprep.subr.mxu0 0.0
      %236 = vmatpush1.msra.mxu0 %v197
      %237 = vmatprep.subr.mxu0 0.0
      %238 = vmatpush1.msra.mxu0 0.0
      %239 = vmatprep.subr.mxu0 0.0
      %240 = vmatpush1.msra.mxu0 0.0
      %241 = vmatprep.subr.mxu0 0.0
      %242 = vmatpush1.msra.mxu0 0.0
      %243 = vmatprep.subr.mxu0 0.0
      %244 = vmatpush1.msra.mxu0 0.0
      %245 = vmatprep.subr.mxu0 0.0
      %246 = vmatpush1.msra.mxu0 0.0
      %247 = vmatprep.subr.mxu0 0.0
      %248 = vmatpush1.msra.mxu0 0.0
      %249 = vmatprep.subr.mxu0 0.0
      %250 = vmatpush1.msra.mxu0 0.0
      %251 = vmatprep.subr.mxu0 0.0
      %252 = vmatpush1.msra.mxu0 0.0
      %253 = vmatprep.subr.mxu0 0.0
      %254 = vmatpush1.msra.mxu0 0.0
      %255 = vmatprep.subr.mxu0 0.0
      %256 = vmatpush1.msra.mxu0 0.0
      %257 = vmatprep.subr.mxu0 0.0
      %258 = vmatpush1.msra.mxu0 0.0
      %259 = vmatprep.subr.mxu0 0.0
      %260 = vmatpush1.msra.mxu0 0.0
      %261 = vmatprep.subr.mxu0 0.0
      %262 = vmatpush1.msra.mxu0 0.0
      %263 = vmatprep.subr.mxu0 0.0
      %264 = vmatpush1.msra.mxu0 0.0
      %265 = vmatprep.subr.mxu0 0.0
      %266 = vmatpush1.msra.mxu0 0.0
      %267 = vmatprep.subr.mxu0 0.0
      %268 = vmatpush1.msra.mxu0 0.0
      %269 = vmatprep.mubr.f32.mxu0 0.0
      %270 = vmatmul.mubr.f32.gmra.mrb[0].mxu0 %v174
      %v271 = vpop.f32.mrb[0].mxu0
      %v272 = vadd.f32 %v203, %v271
      %v273 = vpop.f32.mrb[0].mxu0
      %274 = vmatprep.mubr.f32.mxu0 0.0
      %275 = vmatmul.mubr.f32.gmra.mrb[0].mxu0 %v175
      %v276 = vpop.f32.mrb[0].mxu0
      %v277 = vadd.f32 %v203, %v276
      %v278 = vpop.f32.mrb[0].mxu0
      %279 = vmatprep.mubr.f32.mxu0 0.0
      %280 = vmatmul.mubr.f32.gmra.mrb[0].mxu0 %v176
      %v281 = vpop.f32.mrb[0].mxu0
      %v282 = vadd.f32 %v203, %v281
      %v283 = vpop.f32.mrb[0].mxu0
      %284 = vmatprep.mubr.f32.mxu0 0.0
      %285 = vmatmul.mubr.f32.gmra.mrb[0].mxu0 %v177
      %v286 = vpop.f32.mrb[0].mxu0
      %v287 = vadd.f32 %v203, %v286
      %v288 = vpop.f32.mrb[0].mxu0
      %289 = vmatprep.mubr.f32.mxu0 0.0
      %290 = vmatmul.mubr.f32.gmra.mrb[0].mxu0 %v178
      %v291 = vpop.f32.mrb[0].mxu0
      %v292 = vadd.f32 %v203, %v291
      %v293 = vpop.f32.mrb[0].mxu0
      %294 = vmatprep.mubr.f32.mxu0 0.0
      %295 = vmatmul.mubr.f32.gmra.mrb[0].mxu0 %v179
      %v296 = vpop.f32.mrb[0].mxu0
      %v297 = vadd.f32 %v203, %v296
      %v298 = vpop.f32.mrb[0].mxu0
      %299 = vmatprep.mubr.f32.mxu0 0.0
      %300 = vmatmul.mubr.f32.gmra.mrb[0].mxu0 %v180
      %v301 = vpop.f32.mrb[0].mxu0
      %v302 = vadd.f32 %v203, %v301
      %v303 = vpop.f32.mrb[0].mxu0
      %304 = vmatprep.mubr.f32.mxu0 0.0
      %305 = vmatmul.mubr.f32.gmra.mrb[0].mxu0 %v181
      %v306 = vpop.f32.mrb[0].mxu0
      %v307 = vadd.f32 %v203, %v306
      %v308 = vpop.f32.mrb[0].mxu0
      %309 = vdwg.mxu0
      %vm310 = vcmask 261120
      %311 = vst.msk [vmem:[%s172] sm:$0xff] %vm310, %v272
      %312 = vst.msk [vmem:[%s172 + $0x8] sm:$0xff] %vm310, %v277
      %313 = vst.msk [vmem:[%s172 + $0x10] sm:$0xff] %vm310, %v282
      %314 = vst.msk [vmem:[%s172 + $0x18] sm:$0xff] %vm310, %v287
      %315 = vst.msk [vmem:[%s172 + $0x20] sm:$0xff] %vm310, %v292
      %316 = vst.msk [vmem:[%s172 + $0x28] sm:$0xff] %vm310, %v297
      %317 = vst.msk [vmem:[%s172 + $0x30] sm:$0xff] %vm310, %v302
      %318 = vst.msk [vmem:[%s172 + $0x38] sm:$0xff] %vm310, %v307
      %s319 = smul.u32 8, %s14
      %p320 = scmp.lt.s32.totalorder %s319, 15
      %s321 = scalar_select %p320, %s319, 15
      %s322 = smul.addr %s321, 8
      %s323 = scalar_lea.vmem %s3, %s322
      // Predicated region
      $region33: #{tpu_custom_call.1} parent=31 // pred_check
        %p324 = pneg %p100
      $region34: #{tpu_custom_call.1} parent=31 // pred_check_branch
        %326 = sbr.rel (%p324) target = $region36
      $region35: #{tpu_custom_call.1} parent=31 // pred_region
        %s327 = smul.u32 8, %s14
      $region36: #{tpu_custom_call.1} parent=31 // pred_fallthru
        _
    $region32: #{tpu_custom_call.1} parent=5 // pred_fallthru
      _
    %p328 = scmp.le.s32.totalorder 2, %s9
    // Predicated region
    $region37: #{tpu_custom_call.1} parent=5 // pred_check
      %p329 = pneg %p328
    $region38: #{tpu_custom_call.1} parent=5 // pred_check_branch
      %331 = sbr.rel (%p329) target = $region40
    $region39: #{tpu_custom_call.1} parent=5 // pred_region
      %s332 = ssub.s32 %s9, 2
      // Predicated region
      $region41: #{tpu_custom_call.1} parent=39 // pred_check
        %p333 = pneg %p106
      $region42: #{tpu_custom_call.1} parent=39 // pred_check_branch
        %335 = sbr.rel (%p333) target = $region44
      $region43: #{tpu_custom_call.1} parent=39 // pred_region
        %s336 = smul.u32 8, %s15
        %p337 = scmp.lt.s32.totalorder %s336, 15
        %s338 = scalar_select %p337, %s336, 15
        %s339 = smul.addr %s338, 8
        %s340 = scalar_lea.vmem %s3, %s339
      $region44: #{tpu_custom_call.1} parent=39 // pred_fallthru
        _
    $region40: #{tpu_custom_call.1} parent=5 // pred_fallthru
      _
  $region6: #{tpu_custom_call.1} parent=0 // loop_footer
    %s13 = sadd.s32 1, %s9
  $region7: #{tpu_custom_call.1} parent=0 // loop_footer_branch
    %8 = sbr.rel target = $region3
  $region8: #{tpu_custom_call.1} parent=0 // loop_exit
    _

</llo_original>
